<compile_context>
chip_gen: v6e
topology: v6e:2x2x1
jax: 0.10.0
libtpu: 0.0.40
codegen_flags: <defaults>
</compile_context>

<pallas_src>
import functools

import jax
import jax.numpy as jnp
from jax.experimental import pallas as pl
from jax.experimental.pallas import tpu as pltpu


# ----------------------------- helpers ---------------------------------------
def _round_up(x, m):
    return ((x + m - 1) // m) * m


def _pick_tiles(n):
    """Return (n_pad, tm, tk): padded node count, row tile, contraction tile."""
    if n <= 512:
        n_pad = _round_up(n, 128)
        return n_pad, n_pad, n_pad          # single tile for small graphs
    n_pad = _round_up(n, 512)
    return n_pad, 256, 512                  # streamed tiles for large graphs


def _pad2d(a, rows, cols):
    r, c = a.shape
    return jnp.pad(a, ((0, rows - r), (0, cols - c)))


# ------------------- kernel 1: feature transform X @ W -----------------------
def _transform_kernel(x_ref, w_ref, o_ref):
    o_ref[...] = jnp.dot(
        x_ref[...], w_ref[...], preferred_element_type=jnp.float32
    ).astype(o_ref.dtype)


def feature_transform(x, w, *, tm, out_dtype=jnp.bfloat16):
    n, f_in = x.shape
    h = w.shape[1]
    return pl.pallas_call(
        _transform_kernel,
        out_shape=jax.ShapeDtypeStruct((n, h), out_dtype),
        grid=(n // tm,),
        in_specs=[
            pl.BlockSpec((tm, f_in), lambda i: (i, 0)),
            pl.BlockSpec((f_in, h), lambda i: (0, 0)),
        ],
        out_specs=pl.BlockSpec((tm, h), lambda i: (i, 0)),
        compiler_params=pltpu.CompilerParams(
            dimension_semantics=("parallel",),
        ),
    )(x, w)


# --------------- kernel 2: propagate A_hat @ XW + b (+epilogue) ---------------
def _propagate_kernel(a_ref, xw_ref, b_ref, o_ref, acc_ref, *, activation):
    k = pl.program_id(1)

    @pl.when(k == 0)
    def _init():
        acc_ref[...] = jnp.zeros_like(acc_ref)

    acc_ref[...] += jnp.dot(
        a_ref[...], xw_ref[...], preferred_element_type=jnp.float32
    )

    @pl.when(k == pl.num_programs(1) - 1)
    def _finalize():
        h = acc_ref[...] + b_ref[...]          # f32 epilogue (safe on v5e too)
        if activation == "relu":
            o_ref[...] = jnp.maximum(h, 0.0).astype(o_ref.dtype)
        elif activation == "log_softmax":
            m = jnp.max(h, axis=1, keepdims=True)
            s = h - m
            lse = jnp.log(jnp.sum(jnp.exp(s), axis=1, keepdims=True))
            o_ref[...] = (s - lse).astype(o_ref.dtype)
        else:
            o_ref[...] = h.astype(o_ref.dtype)


def propagate(a_hat, xw, bias, *, tm, tk, activation, out_dtype):
    n = a_hat.shape[0]
    h = xw.shape[1]
    grid = (n // tm, n // tk)

    # Size scoped VMEM from the actual (double-buffered) working set + headroom.
    a_block = tm * tk * a_hat.dtype.itemsize
    xw_block = tk * h * xw.dtype.itemsize
    out_block = tm * h * jnp.dtype(out_dtype).itemsize
    acc_block = tm * h * 4
    vmem_limit = int(
        min(2 * (a_block + xw_block + out_block) + acc_block + (8 << 20), 64 << 20)
    )

    cost = pl.CostEstimate(
        flops=2 * n * n * h,
        transcendentals=(n * h if activation == "log_softmax" else 0),
        bytes_accessed=(
            n * n * a_hat.dtype.itemsize
            + grid[0] * n * h * xw.dtype.itemsize
            + n * h * jnp.dtype(out_dtype).itemsize
        ),
    )

    return pl.pallas_call(
        functools.partial(_propagate_kernel, activation=activation),
        out_shape=jax.ShapeDtypeStruct((n, h), out_dtype),
        grid_spec=pltpu.PrefetchScalarGridSpec(
            num_scalar_prefetch=0,
            grid=grid,
            in_specs=[
                pl.BlockSpec((tm, tk), lambda i, k: (i, k)),   # A_hat row tile
                pl.BlockSpec((tk, h), lambda i, k: (k, 0)),    # XW K-slice
                pl.BlockSpec((1, h), lambda i, k: (0, 0)),     # bias
            ],
            out_specs=pl.BlockSpec((tm, h), lambda i, k: (i, 0)),
            scratch_shapes=[pltpu.VMEM((tm, h), jnp.float32)],
        ),
        compiler_params=pltpu.CompilerParams(
            dimension_semantics=("parallel", "arbitrary"),
            vmem_limit_bytes=vmem_limit,
        ),
        cost_estimate=cost,
    )(a_hat, xw, bias)


# ------------------------------ full forward ---------------------------------
def gcn_net_forward(a_hat, x, w1, b1, w2, b2):
    """relu(A@(X@W1)+b1) -> dropout(eval=identity) -> log_softmax(A@(H1@W2)+b2)."""
    n = x.shape[0]
    n_classes = w2.shape[1]

    n_pad, tm, tk = _pick_tiles(n)
    c_pad = _round_up(max(n_classes, 1), 128)   # lane-dense final output

    f32, bf16 = jnp.float32, jnp.bfloat16

    # bf16 MXU inputs; node axis zero-padded to the tile grid.
    a_p = _pad2d(a_hat, n_pad, n_pad).astype(bf16)
    x_p = _pad2d(x, n_pad, x.shape[1]).astype(bf16)
    w1_b = w1.astype(bf16)
    b1_f = b1.reshape(1, -1).astype(f32)

    # Pad class dim to 128 lanes. Padded-class bias = -1e30 so the in-kernel
    # log_softmax over 128 lanes reduces exactly to log_softmax over real classes.
    w2_p = _pad2d(w2, w2.shape[0], c_pad).astype(bf16)
    b2_p = jnp.full((1, c_pad), -1e30, dtype=f32)
    b2_p = b2_p.at[0, :n_classes].set(b2.reshape(-1).astype(f32))

    # Layer 1: H1 = relu(A @ (X @ W1) + b1)
    xw1 = feature_transform(x_p, w1_b, tm=tm, out_dtype=bf16)         # (n_pad, H)
    h1 = propagate(a_p, xw1, b1_f, tm=tm, tk=tk,
                   activation="relu", out_dtype=bf16)                 # (n_pad, H)

    # TODO(synk): F.dropout(x, training=self.training) — eval mode is identity;
    # training parity would need pltpu.prng_seed + pltpu.prng_random_bits masking.

    # Layer 2: log_softmax(A @ (H1 @ W2) + b2)
    hw2 = feature_transform(h1, w2_p, tm=tm, out_dtype=bf16)          # (n_pad, Cp)
    out = propagate(a_p, hw2, b2_p, tm=tm, tk=tk,
                    activation="log_softmax", out_dtype=f32)          # (n_pad, Cp)

    return out[:n, :n_classes]


# ------------------------------- glue (JAX) -----------------------------------
def build_normalized_adjacency(edge_index, num_nodes):
    """GCNConv normalization: A_hat = D^{-1/2} (A + I) D^{-1/2}."""
    src, dst = edge_index[0], edge_index[1]
    adj = jnp.zeros((num_nodes, num_nodes), dtype=jnp.float32)
    adj = adj.at[dst, src].add(1.0)                       # row=dst aggregates col=src
    adj = adj + jnp.eye(num_nodes, dtype=jnp.float32)     # self loops
    deg = jnp.sum(adj, axis=1)
    d_inv_sqrt = jnp.where(deg > 0, 1.0 / jnp.sqrt(deg), 0.0)
    return d_inv_sqrt[:, None] * adj * d_inv_sqrt[None, :]


def glorot(key, shape):
    fan_in, fan_out = shape
    limit = jnp.sqrt(6.0 / (fan_in + fan_out))
    return jax.random.uniform(key, shape, jnp.float32, -limit, limit)


if __name__ == "__main__":
    # Shapes consistent with the module: num_node_features -> 32,
    # hidden -> 16 (hard-coded in Net), num_classes -> 4.
    # NOTE: at this toy size the kernel is pure launch overhead; the tiling /
    # bf16 / megacore wins only show up at realistic N (hundreds+).
    N_NODES = 8
    F_IN = 32
    HIDDEN = 16
    N_CLASSES = 4

    key = jax.random.PRNGKey(0)
    k_x, k_w1, k_w2 = jax.random.split(key, 3)

    x = jax.random.normal(k_x, (N_NODES, F_IN), dtype=jnp.float32)
    src = jnp.arange(N_NODES, dtype=jnp.int32)
    edge_index = jnp.stack(
        [jnp.concatenate([src, src]),
         jnp.concatenate([(src + 1) % N_NODES, (src + 2) % N_NODES])],
        axis=0,
    )

    w1 = glorot(k_w1, (F_IN, HIDDEN))
    b1 = jnp.zeros((HIDDEN,), dtype=jnp.float32)
    w2 = glorot(k_w2, (HIDDEN, N_CLASSES))
    b2 = jnp.zeros((N_CLASSES,), dtype=jnp.float32)

    a_hat = build_normalized_adjacency(edge_index, N_NODES)

    out = gcn_net_forward(a_hat, x, w1, b1, w2, b2)
    out = jax.block_until_ready(out)

    # Pure-JAX reference mirroring the kernel's bf16-input / f32-accumulate flow.
    def ref_forward(a, xx, ww1, bb1, ww2, bb2):
        f32, bf16 = jnp.float32, jnp.bfloat16
        a_b = a.astype(bf16).astype(f32)
        x_b = xx.astype(bf16).astype(f32)
        w1_b = ww1.astype(bf16).astype(f32)
        w2_b = ww2.astype(bf16).astype(f32)
        xw1 = (x_b @ w1_b).astype(bf16).astype(f32)
        h1 = jnp.maximum(a_b @ xw1 + bb1[None, :], 0.0).astype(bf16).astype(f32)
        hw2 = (h1 @ w2_b).astype(bf16).astype(f32)
        logits = a_b @ hw2 + bb2[None, :]
        return jax.nn.log_softmax(logits, axis=1)

    ref = ref_forward(a_hat, x, w1, b1, w2, b2)

    row_sums = jnp.sum(jnp.exp(out), axis=1)
    assert out.shape == (N_NODES, N_CLASSES)
    assert bool(jnp.all(jnp.abs(row_sums - 1.0) < 1e-4))
    assert bool(jnp.max(jnp.abs(out - ref)) < 3e-2)
    print("KERNEL_OK")
</pallas_src>

<mosaic_0001>
module attributes {stable_mosaic.version = 11 : i64} {
  func.func @_transform_kernel(%arg0: i32, %arg1: memref<128x32xbf16, #tpu.memory_space<vmem>>, %arg2: memref<32x16xbf16, #tpu.memory_space<vmem>>, %arg3: memref<128x16xbf16, #tpu.memory_space<vmem>>) attributes {dimension_semantics = [#tpu.dimension_semantics<parallel>], iteration_bounds = array<i64: 1>, scalar_prefetch = 0 : i64, scratch_operands = 0 : i64, tpu.core_type = #tpu.core_type<tc>, window_params = [{transform_indices = @transform_0, window_bounds = array<i64: 128, 32>}, {pipeline_mode = #tpu.pipeline_mode<synchronous>, transform_indices = @transform_1, window_bounds = array<i64: 32, 16>}, {transform_indices = @transform_2, window_bounds = array<i64: 128, 16>}]} {
    %c0 = arith.constant 0 : index
    %c0_0 = arith.constant 0 : index
    %0 = vector.load %arg1[%c0, %c0_0] : memref<128x32xbf16, #tpu.memory_space<vmem>>, vector<128x32xbf16>
    %c0_1 = arith.constant 0 : index
    %c0_2 = arith.constant 0 : index
    %1 = vector.load %arg2[%c0_1, %c0_2] : memref<32x16xbf16, #tpu.memory_space<vmem>>, vector<32x16xbf16>
    %cst = arith.constant dense<0.000000e+00> : vector<128x16xf32>
    %2 = tpu.matmul %0, %1, %cst {dimension_numbers = #tpu.dot_dimension_numbers<[1], [0], [0], [1], [0, 0, 1, 1], [], []>} : vector<128x32xbf16>, vector<32x16xbf16>, vector<128x16xf32> -> vector<128x16xf32>
    %3 = arith.truncf %2 : vector<128x16xf32> to vector<128x16xbf16>
    %c0_3 = arith.constant 0 : index
    %c0_4 = arith.constant 0 : index
    %4 = vector.load %arg3[%c0_3, %c0_4] : memref<128x16xbf16, #tpu.memory_space<vmem>>, vector<128x16xbf16>
    tpu.vector_store %arg3[%c0_3, %c0_4], %3 {strides = array<i32>} : memref<128x16xbf16, #tpu.memory_space<vmem>>, vector<128x16xbf16>,
    return
  }
  func.func @transform_0(%arg0: i32) -> (i32, i32) {
    %c0_i32 = arith.constant 0 : i32
    %c0_i32_0 = arith.constant 0 : i32
    return %arg0, %c0_i32 : i32, i32
  }
  func.func @transform_1(%arg0: i32) -> (i32, i32) {
    %c0_i32 = arith.constant 0 : i32
    %c0_i32_0 = arith.constant 0 : i32
    %c0_i32_1 = arith.constant 0 : i32
    return %c0_i32, %c0_i32_0 : i32, i32
  }
  func.func @transform_2(%arg0: i32) -> (i32, i32) {
    %c0_i32 = arith.constant 0 : i32
    %c0_i32_0 = arith.constant 0 : i32
    return %arg0, %c0_i32 : i32, i32
  }
}

</mosaic_0001>

<llo_original>
// kernel: tpu_custom_call.1
$region0: #{tpu_custom_call.1}
  #allocation0 [shape = 'u32[]', space=smem, size = 0x4, offset = 0x4, fixed_abs, tag = 'smem constant byte address 0x4 - core index']
  #allocation1 [shape = 'u32[144,128]{1,0:T(1,128)}', space=vmem, size = 0x12000, scoped, tag = 'internal scratch']
  %s0 = inlined_call_operand.vmem [shape: bf16[128,32], index: 0, kind: input, shape index: {}]
  %s1 = inlined_call_operand.vmem [shape: bf16[32,16], index: 1, kind: input, shape index: {}]
  %s2 = inlined_call_operand.vmem [shape: bf16[128,16], index: 2, kind: output, shape index: {}]
  %s3 = sld [smem:[#allocation0]]
  $region18: #{tpu_custom_call.1} parent=0
    _
  %s5 = ssub.s32 1, %s3
  %s6 = scalar_select 0, %s5, %s3
  // Predicated region
  $region2: #{tpu_custom_call.1} parent=0 // pred_check
    _
  $region3: #{tpu_custom_call.1} parent=0 // pred_check_branch
    %8 = sbr.rel (0) target = $region5
  $region4: #{tpu_custom_call.1} parent=0 // pred_region
    _
  $region5: #{tpu_custom_call.1} parent=0 // pred_fallthru
    _
  // Predicated region
  $region6: #{tpu_custom_call.1} parent=0 // pred_check
    _
  $region7: #{tpu_custom_call.1} parent=0 // pred_check_branch
    %10 = sbr.rel (0) target = $region9
  $region8: #{tpu_custom_call.1} parent=0 // pred_region
    _
  $region9: #{tpu_custom_call.1} parent=0 // pred_fallthru
    _
  %v12 = vld [vmem:[%s0] sm:$0xf]
  %v13 = vld [vmem:[%s0 + $0x4] sm:$0xf]
  %v14 = vld [vmem:[%s0 + $0x8] sm:$0xf]
  %v15 = vld [vmem:[%s0 + $0xc] sm:$0xf]
  %v16 = vld [vmem:[%s0 + $0x10] sm:$0xf]
  %v17 = vld [vmem:[%s0 + $0x14] sm:$0xf]
  %v18 = vld [vmem:[%s0 + $0x18] sm:$0xf]
  %v19 = vld [vmem:[%s0 + $0x1c] sm:$0xf]
  %v20 = vld [vmem:[%s0 + $0x20] sm:$0xf]
  %v21 = vld [vmem:[%s0 + $0x24] sm:$0xf]
  %v22 = vld [vmem:[%s0 + $0x28] sm:$0xf]
  %v23 = vld [vmem:[%s0 + $0x2c] sm:$0xf]
  %v24 = vld [vmem:[%s0 + $0x30] sm:$0xf]
  %v25 = vld [vmem:[%s0 + $0x34] sm:$0xf]
  %v26 = vld [vmem:[%s0 + $0x38] sm:$0xf]
  %v27 = vld [vmem:[%s0 + $0x3c] sm:$0xf]
  %v28 = vld [vmem:[%s1] sm:$0xf]
  %v29 = vld [vmem:[%s1 + $0x4] sm:$0xf]
  %v30 = vld [vmem:[%s1 + $0x8] sm:$0xf]
  %v31 = vld [vmem:[%s1 + $0xc] sm:$0xf]
  %v48 = vunpack.c.l.b16 %v12
  %v49 = vunpack.c.l.b16 %v13
  %v50 = vunpack.c.l.b16 %v14
  %v51 = vunpack.c.l.b16 %v15
  %v52 = vunpack.c.l.b16 %v16
  %v53 = vunpack.c.l.b16 %v17
  %v54 = vunpack.c.l.b16 %v18
  %v55 = vunpack.c.l.b16 %v19
  %v56 = vunpack.c.l.b16 %v20
  %v57 = vunpack.c.l.b16 %v21
  %v58 = vunpack.c.l.b16 %v22
  %v59 = vunpack.c.l.b16 %v23
  %v60 = vunpack.c.l.b16 %v24
  %v61 = vunpack.c.l.b16 %v25
  %v62 = vunpack.c.l.b16 %v26
  %v63 = vunpack.c.l.b16 %v27
  %v64 = vpack.c.b16 %v49, %v48
  %v65 = vpack.c.b16 %v51, %v50
  %v66 = vpack.c.b16 %v53, %v52
  %v67 = vpack.c.b16 %v55, %v54
  %v68 = vpack.c.b16 %v57, %v56
  %v69 = vpack.c.b16 %v59, %v58
  %v70 = vpack.c.b16 %v61, %v60
  %v71 = vpack.c.b16 %v63, %v62
  %v76 = vunpack.c.l.b16 %v28
  %v77 = vunpack.c.l.b16 %v29
  %v78 = vunpack.c.l.b16 %v30
  %v79 = vunpack.c.l.b16 %v31
  %v80 = vpack.c.b16 %v77, %v76
  %v81 = vpack.c.b16 %v79, %v78
  %vm84 = vcmask 261120
  %v86 = vsel %vm84, %v64, 0
  %v89 = vsel %vm84, %v65, 0
  %v92 = vsel %vm84, %v66, 0
  %v95 = vsel %vm84, %v67, 0
  %v98 = vsel %vm84, %v68, 0
  %v101 = vsel %vm84, %v69, 0
  %v104 = vsel %vm84, %v70, 0
  %v107 = vsel %vm84, %v71, 0
  %109 = vmatprep.subr.bf16.mxu0 0
  %110 = vmatpush1.bf16.msra.mxu0 0
  %111 = vmatprep.subr.bf16.mxu0 0
  %112 = vmatpush1.bf16.msra.mxu0 0
  %113 = vmatprep.subr.bf16.mxu0 0
  %114 = vmatpush1.bf16.msra.mxu0 0
  %115 = vmatprep.subr.bf16.mxu0 0
  %116 = vmatpush1.bf16.msra.mxu0 0
  %117 = vmatprep.subr.bf16.mxu0 0
  %118 = vmatpush1.bf16.msra.mxu0 0
  %119 = vmatprep.subr.bf16.mxu0 0
  %120 = vmatpush1.bf16.msra.mxu0 0
  %121 = vmatprep.subr.bf16.mxu0 0
  %122 = vmatpush1.bf16.msra.mxu0 %v81
  %123 = vmatprep.subr.bf16.mxu0 0
  %124 = vmatpush1.bf16.msra.mxu0 %v80
  %125 = vmatprep.subr.bf16.mxu0 0
  %126 = vmatpush2.bf16.msra.mxu0 0
  %127 = vmatprep.subr.bf16.mxu0 0
  %128 = vmatpush2.bf16.msra.mxu0 0
  %129 = vmatprep.subr.bf16.mxu0 0
  %130 = vmatpush2.bf16.msra.mxu0 0
  %131 = vmatprep.subr.bf16.mxu0 0
  %132 = vmatpush2.bf16.msra.mxu0 0
  %133 = vmatprep.subr.bf16.mxu0 0
  %134 = vmatpush2.bf16.msra.mxu0 0
  %135 = vmatprep.subr.bf16.mxu0 0
  %136 = vmatpush2.bf16.msra.mxu0 0
  %137 = vmatprep.subr.bf16.mxu0 0
  %138 = vmatpush2.bf16.msra.mxu0 0
  %139 = vmatprep.subr.bf16.mxu0 0
  %140 = vmatpush2.bf16.msra.mxu0 0
  %141 = vmatprep.mubr.bf16.mxu0 0
  %142 = vmatmul.mubr.bf16.gmra.mxu0 %v86
  %v143 = vpop.f32.mrf.mxu0
  %v144 = vadd.f32 0.0, %v143
  %v145 = vpop.f32.mrf.mxu0
  %v146 = vpop.f32.mrf.mxu0
  %v147 = vadd.f32 0.0, %v146
  %v148 = vpop.f32.mrf.mxu0
  %149 = vmatprep.mubr.bf16.mxu0 0
  %150 = vmatmul.mubr.bf16.gmra.mxu0 %v89
  %v151 = vpop.f32.mrf.mxu0
  %v152 = vadd.f32 0.0, %v151
  %v153 = vpop.f32.mrf.mxu0
  %v154 = vpop.f32.mrf.mxu0
  %v155 = vadd.f32 0.0, %v154
  %v156 = vpop.f32.mrf.mxu0
  %157 = vmatprep.mubr.bf16.mxu0 0
  %158 = vmatmul.mubr.bf16.gmra.mxu0 %v92
  %v159 = vpop.f32.mrf.mxu0
  %v160 = vadd.f32 0.0, %v159
  %v161 = vpop.f32.mrf.mxu0
  %v162 = vpop.f32.mrf.mxu0
  %v163 = vadd.f32 0.0, %v162
  %v164 = vpop.f32.mrf.mxu0
  %165 = vmatprep.mubr.bf16.mxu0 0
  %166 = vmatmul.mubr.bf16.gmra.mxu0 %v95
  %v167 = vpop.f32.mrf.mxu0
  %v168 = vadd.f32 0.0, %v167
  %v169 = vpop.f32.mrf.mxu0
  %v170 = vpop.f32.mrf.mxu0
  %v171 = vadd.f32 0.0, %v170
  %v172 = vpop.f32.mrf.mxu0
  %173 = vmatprep.mubr.bf16.mxu0 0
  %174 = vmatmul.mubr.bf16.gmra.mxu0 %v98
  %v175 = vpop.f32.mrf.mxu0
  %v176 = vadd.f32 0.0, %v175
  %v177 = vpop.f32.mrf.mxu0
  %v178 = vpop.f32.mrf.mxu0
  %v179 = vadd.f32 0.0, %v178
  %v180 = vpop.f32.mrf.mxu0
  %181 = vmatprep.mubr.bf16.mxu0 0
  %182 = vmatmul.mubr.bf16.gmra.mxu0 %v101
  %v183 = vpop.f32.mrf.mxu0
  %v184 = vadd.f32 0.0, %v183
  %v185 = vpop.f32.mrf.mxu0
  %v186 = vpop.f32.mrf.mxu0
  %v187 = vadd.f32 0.0, %v186
  %v188 = vpop.f32.mrf.mxu0
  %189 = vmatprep.mubr.bf16.mxu0 0
  %190 = vmatmul.mubr.bf16.gmra.mxu0 %v104
  %v191 = vpop.f32.mrf.mxu0
  %v192 = vadd.f32 0.0, %v191
  %v193 = vpop.f32.mrf.mxu0
  %v194 = vpop.f32.mrf.mxu0
  %v195 = vadd.f32 0.0, %v194
  %v196 = vpop.f32.mrf.mxu0
  %197 = vmatprep.mubr.bf16.mxu0 0
  %198 = vmatmul.mubr.bf16.gmra.mxu0 %v107
  %v199 = vpop.f32.mrf.mxu0
  %v200 = vadd.f32 0.0, %v199
  %v201 = vpop.f32.mrf.mxu0
  %v202 = vpop.f32.mrf.mxu0
  %v203 = vadd.f32 0.0, %v202
  %v204 = vpop.f32.mrf.mxu0
  %205 = vdwg.mxu0
  %v206 = vpack.c.bf16 %v147, %v144
  %v207 = vpack.c.bf16 %v155, %v152
  %v208 = vpack.c.bf16 %v163, %v160
  %v209 = vpack.c.bf16 %v171, %v168
  %v210 = vpack.c.bf16 %v179, %v176
  %v211 = vpack.c.bf16 %v187, %v184
  %v212 = vpack.c.bf16 %v195, %v192
  %v213 = vpack.c.bf16 %v203, %v200
  %v222 = vunpack.c.l.b16 %v206
  %v223 = vunpack.c.h.b16 %v206
  %v224 = vunpack.c.l.b16 %v207
  %v225 = vunpack.c.h.b16 %v207
  %v226 = vunpack.c.l.b16 %v208
  %v227 = vunpack.c.h.b16 %v208
  %v228 = vunpack.c.l.b16 %v209
  %v229 = vunpack.c.h.b16 %v209
  %v230 = vunpack.c.l.b16 %v210
  %v231 = vunpack.c.h.b16 %v210
  %v232 = vunpack.c.l.b16 %v211
  %v233 = vunpack.c.h.b16 %v211
  %v234 = vunpack.c.l.b16 %v212
  %v235 = vunpack.c.h.b16 %v212
  %v236 = vunpack.c.l.b16 %v213
  %v237 = vunpack.c.h.b16 %v213
  %v238 = vpack.c.b16 %v222, %v222
  %v239 = vpack.c.b16 %v223, %v223
  %v240 = vpack.c.b16 %v224, %v224
  %v241 = vpack.c.b16 %v225, %v225
  %v242 = vpack.c.b16 %v226, %v226
  %v243 = vpack.c.b16 %v227, %v227
  %v244 = vpack.c.b16 %v228, %v228
  %v245 = vpack.c.b16 %v229, %v229
  %v246 = vpack.c.b16 %v230, %v230
  %v247 = vpack.c.b16 %v231, %v231
  %v248 = vpack.c.b16 %v232, %v232
  %v249 = vpack.c.b16 %v233, %v233
  %v250 = vpack.c.b16 %v234, %v234
  %v251 = vpack.c.b16 %v235, %v235
  %v252 = vpack.c.b16 %v236, %v236
  %v253 = vpack.c.b16 %v237, %v237
  %vm270 = vcmask 125952
  %271 = vst.msk [vmem:[%s2] sm:$0xf] %vm270, %v238
  %272 = vst.msk [vmem:[%s2 + $0x4] sm:$0xf] %vm270, %v239
  %273 = vst.msk [vmem:[%s2 + $0x8] sm:$0xf] %vm270, %v240
  %274 = vst.msk [vmem:[%s2 + $0xc] sm:$0xf] %vm270, %v241
  %275 = vst.msk [vmem:[%s2 + $0x10] sm:$0xf] %vm270, %v242
  %276 = vst.msk [vmem:[%s2 + $0x14] sm:$0xf] %vm270, %v243
  %277 = vst.msk [vmem:[%s2 + $0x18] sm:$0xf] %vm270, %v244
  %278 = vst.msk [vmem:[%s2 + $0x1c] sm:$0xf] %vm270, %v245
  %279 = vst.msk [vmem:[%s2 + $0x20] sm:$0xf] %vm270, %v246
  %280 = vst.msk [vmem:[%s2 + $0x24] sm:$0xf] %vm270, %v247
  %281 = vst.msk [vmem:[%s2 + $0x28] sm:$0xf] %vm270, %v248
  %282 = vst.msk [vmem:[%s2 + $0x2c] sm:$0xf] %vm270, %v249
  %283 = vst.msk [vmem:[%s2 + $0x30] sm:$0xf] %vm270, %v250
  %284 = vst.msk [vmem:[%s2 + $0x34] sm:$0xf] %vm270, %v251
  %285 = vst.msk [vmem:[%s2 + $0x38] sm:$0xf] %vm270, %v252
  %286 = vst.msk [vmem:[%s2 + $0x3c] sm:$0xf] %vm270, %v253
  // Predicated region
  $region10: #{tpu_custom_call.1} parent=0 // pred_check
    _
  $region11: #{tpu_custom_call.1} parent=0 // pred_check_branch
    %288 = sbr.rel (0) target = $region13
  $region12: #{tpu_custom_call.1} parent=0 // pred_region
    _
  $region13: #{tpu_custom_call.1} parent=0 // pred_fallthru
    _
  // Predicated region
  $region14: #{tpu_custom_call.1} parent=0 // pred_check
    _
  $region15: #{tpu_custom_call.1} parent=0 // pred_check_branch
    %290 = sbr.rel (0) target = $region17
  $region16: #{tpu_custom_call.1} parent=0 // pred_region
    _
  $region17: #{tpu_custom_call.1} parent=0 // pred_fallthru
    _

</llo_original>
